<compile_context>
chip_gen: v6e
topology: v6e:2x2x1
jax: 0.10.0
libtpu: 0.0.40
codegen_flags: <defaults>
</compile_context>

<pallas_src>
import functools

import jax
import jax.numpy as jnp
from jax import lax
from jax.experimental import pallas as pl
from jax.experimental.pallas import tpu as pltpu

_POISON = 1e30                      # ||w||^2 for fake (padded) centroids
_VMEM_BUDGET = 48 * 1024 * 1024     # conservative across v5e/v6e/v7x


def _round_up(x: int, m: int) -> int:
    return (x + m - 1) // m * m


def _cdiv(a: int, b: int) -> int:
    return -(-a // b)


def _vmem_bytes(tn: int, d: int, kp: int) -> int:
    x_buf = 2 * tn * d * 4               # double-buffered batch tile
    o_buf = 2 * tn * kp * 4              # double-buffered output tile
    w_buf = 2 * (d * kp * 4 + kp * 4)    # centroids + ||w||^2 (2-deep default)
    tmp = 3 * tn * kp * 4                # dist / t / q live values (rough)
    return x_buf + o_buf + w_buf + tmp


def clustering_kernel(x_ref, wT_ref, w2_ref, o_ref, *, alpha: float,
                      use_bf16_matmul: bool):
    """One (TN, D) batch tile against all (D, Kp) pre-transposed centroids.

    x_ref  : (TN, D)  batch tile (rows beyond N zero-padded, any float dtype)
    wT_ref : (D, Kp)  centroids transposed; padded columns are all-zero
    w2_ref : (1, Kp)  ||w||^2 per centroid; padded columns hold a huge poison
                      value so their q underflows to ~0 (no mask pass needed)
    o_ref  : (TN, Kp) soft assignments
    """
    x = x_ref[...].astype(jnp.float32)

    # ||x - w||^2 = ||x||^2 + ||w||^2 - 2 x.w   (cross term on the MXU).
    if use_bf16_matmul:
        xw = jnp.dot(x_ref[...].astype(jnp.bfloat16),
                     wT_ref[...].astype(jnp.bfloat16),
                     preferred_element_type=jnp.float32)           # (TN, Kp)
    else:
        xw = jnp.dot(x, wT_ref[...].astype(jnp.float32),
                     preferred_element_type=jnp.float32)           # (TN, Kp)
    x2 = jnp.sum(x * x, axis=1, keepdims=True)                     # (TN, 1)
    dist = jnp.maximum(x2 + w2_ref[...] - 2.0 * xw, 0.0)           # (TN, Kp)

    t = 1.0 + dist * (1.0 / alpha)
    p = (alpha + 1.0) / 2.0             # trace-time constant
    if p == 1.0:                        # default alpha = 1.0: plain reciprocal
        q = 1.0 / t
    elif p == 0.5:
        q = lax.rsqrt(t)
    else:
        q = t ** (-p)                   # single exp/log pair on the EUP

    # Exact row normalization: denom is only (TN, 1), so the exact divide is
    # essentially free and guarantees rows sum to 1 at full f32 precision.
    denom = jnp.sum(q, axis=1, keepdims=True)
    o_ref[...] = (q / denom).astype(o_ref.dtype)


def clustering_layer(x: jax.Array, weight: jax.Array, alpha: float = 1.0,
                     *, block_n: int = 1024, use_bf16_matmul: bool = False,
                     out_dtype=None) -> jax.Array:
    """Pallas wrapper: batch-tiled grid, centroids resident, lane-dense out."""
    n, d = x.shape
    k, d_w = weight.shape
    assert d == d_w, "feature dims must match"
    out_dtype = jnp.dtype(out_dtype) if out_dtype is not None else x.dtype

    kp = _round_up(k, 128)              # lane-dense output columns

    # Centroid prep (tiny, one-time): f32, transpose to (D, Kp), poisoned
    # ||w||^2 entries for padded columns.
    w32 = weight.astype(jnp.float32)
    w_t = jnp.pad(w32, ((0, kp - k), (0, 0))).T                    # (D, Kp)
    w2 = jnp.pad(jnp.sum(w32 * w32, axis=1), (0, kp - k),
                 constant_values=_POISON)[None, :]                 # (1, Kp)

    # Balanced batch tiles: minimize padded rows, keep >= 2 grid steps when the
    # batch allows it (v7x megacore), and respect the VMEM budget.
    steps = max(1, _cdiv(n, block_n))
    if steps == 1 and n > 8:
        steps = 2
    tn = _round_up(_cdiv(n, steps), 8)
    while tn > 8 and _vmem_bytes(tn, d, kp) > _VMEM_BUDGET:
        tn = _round_up(_cdiv(tn, 2), 8)
    npad = _round_up(n, tn)

    # x is passed through untouched (no cast, no D pad); only pad the handful
    # of trailing rows when N is not a multiple of the tile.
    x_in = x if npad == n else jnp.pad(x, ((0, npad - n), (0, 0)))

    kernel = functools.partial(clustering_kernel, alpha=float(alpha),
                               use_bf16_matmul=use_bf16_matmul)
    out = pl.pallas_call(
        kernel,
        out_shape=jax.ShapeDtypeStruct((npad, kp), out_dtype),
        grid=(npad // tn,),
        in_specs=[
            pl.BlockSpec((tn, d), lambda i: (i, 0)),    # batch tile (pipelined)
            pl.BlockSpec((d, kp), lambda i: (0, 0)),    # centroids, resident
            pl.BlockSpec((1, kp), lambda i: (0, 0)),    # ||w||^2 (+ poison)
        ],
        out_specs=pl.BlockSpec((tn, kp), lambda i: (i, 0)),
        compiler_params=pltpu.CompilerParams(
            dimension_semantics=("parallel",),
            vmem_limit_bytes=64 * 1024 * 1024),
    )(x_in, w_t, w2)
    return out[:n, :k]


def clustering_layer_ref(x, weight, alpha=1.0):
    """Pure-JAX reference mirroring the PyTorch forward."""
    diff = x[:, None, :] - weight[None, :, :]
    dist = jnp.sum(diff * diff, axis=2)
    q = 1.0 / (1.0 + dist / alpha)
    q = q ** ((alpha + 1.0) / 2.0)
    return q / jnp.sum(q, axis=1, keepdims=True)


def xavier_uniform(key, out_features, in_features):
    # torch.nn.init.xavier_uniform_: U(-a, a), a = sqrt(6 / (fan_in + fan_out))
    bound = (6.0 / (in_features + out_features)) ** 0.5
    return jax.random.uniform(
        key, (out_features, in_features), jnp.float32, minval=-bound, maxval=bound
    )


if __name__ == "__main__":
    # Small shapes consistent with the module: batch=8, in_features=32, 16 clusters.
    batch, in_features, out_features, alpha = 8, 32, 16, 1.0

    key = jax.random.PRNGKey(0)
    kx, kw = jax.random.split(key)
    x = jax.random.normal(kx, (batch, in_features), jnp.float32)
    weight = xavier_uniform(kw, out_features, in_features)

    q = clustering_layer(x, weight, alpha)
    q = jax.block_until_ready(q)

    q_ref = clustering_layer_ref(x, weight, alpha)
    assert q.shape == (batch, out_features)
    assert jnp.allclose(q, q_ref, atol=2e-4, rtol=2e-4), "mismatch vs reference"
    assert jnp.allclose(jnp.sum(q, axis=1), 1.0, atol=1e-4), "rows must sum to 1"

    print("KERNEL_OK")
</pallas_src>

<mosaic_0001>
module attributes {stable_mosaic.version = 11 : i64} {
  func.func @clustering_kernel(%arg0: i32, %arg1: memref<8x32xf32, #tpu.memory_space<vmem>>, %arg2: memref<32x128xf32, #tpu.memory_space<vmem>>, %arg3: memref<1x128xf32, #tpu.memory_space<vmem>>, %arg4: memref<8x128xf32, #tpu.memory_space<vmem>>) attributes {dimension_semantics = [#tpu.dimension_semantics<parallel>], iteration_bounds = array<i64: 1>, scalar_prefetch = 0 : i64, scratch_operands = 0 : i64, tpu.core_type = #tpu.core_type<tc>, window_params = [{transform_indices = @transform_0, window_bounds = array<i64: 8, 32>}, {pipeline_mode = #tpu.pipeline_mode<synchronous>, transform_indices = @transform_1, window_bounds = array<i64: 32, 128>}, {pipeline_mode = #tpu.pipeline_mode<synchronous>, transform_indices = @transform_2, window_bounds = array<i64: 1, 128>}, {transform_indices = @transform_3, window_bounds = array<i64: 8, 128>}]} {
    %c0 = arith.constant 0 : index
    %c0_0 = arith.constant 0 : index
    %0 = vector.load %arg1[%c0, %c0_0] : memref<8x32xf32, #tpu.memory_space<vmem>>, vector<8x32xf32>
    %c0_1 = arith.constant 0 : index
    %c0_2 = arith.constant 0 : index
    %1 = vector.load %arg2[%c0_1, %c0_2] : memref<32x128xf32, #tpu.memory_space<vmem>>, vector<32x128xf32>
    %cst = arith.constant dense<0.000000e+00> : vector<8x128xf32>
    %2 = tpu.matmul %0, %1, %cst {dimension_numbers = #tpu.dot_dimension_numbers<[1], [0], [0], [1], [0, 0, 1, 1], [], []>} : vector<8x32xf32>, vector<32x128xf32>, vector<8x128xf32> -> vector<8x128xf32>
    %3 = arith.mulf %0, %0 : vector<8x32xf32>
    %cst_3 = arith.constant dense<0.000000e+00> : vector<8xf32>
    %4 = vector.multi_reduction <add>, %3, %cst_3 [1] : vector<8x32xf32> to vector<8xf32>
    %5 = vector.shape_cast %4 : vector<8xf32> to vector<8x1xf32>
    %c0_4 = arith.constant 0 : index
    %c0_5 = arith.constant 0 : index
    %6 = vector.load %arg3[%c0_4, %c0_5] : memref<1x128xf32, #tpu.memory_space<vmem>>, vector<1x128xf32>
    %7 = vector.broadcast %5 : vector<8x1xf32> to vector<8x128xf32>
    %8 = vector.broadcast %6 : vector<1x128xf32> to vector<8x128xf32>
    %9 = arith.addf %7, %8 : vector<8x128xf32>
    %cst_6 = arith.constant 2.000000e+00 : f32
    %10 = vector.broadcast %cst_6 : f32 to vector<8x128xf32>
    %11 = arith.mulf %10, %2 : vector<8x128xf32>
    %12 = arith.subf %9, %11 : vector<8x128xf32>
    %cst_7 = arith.constant 0.000000e+00 : f32
    %13 = vector.broadcast %cst_7 : f32 to vector<8x128xf32>
    %14 = arith.maximumf %12, %13 : vector<8x128xf32>
    %cst_8 = arith.constant 1.000000e+00 : f32
    %15 = vector.broadcast %cst_8 : f32 to vector<8x128xf32>
    %16 = arith.mulf %14, %15 : vector<8x128xf32>
    %cst_9 = arith.constant 1.000000e+00 : f32
    %17 = vector.broadcast %cst_9 : f32 to vector<8x128xf32>
    %18 = arith.addf %17, %16 : vector<8x128xf32>
    %cst_10 = arith.constant 1.000000e+00 : f32
    %19 = vector.broadcast %cst_10 : f32 to vector<8x128xf32>
    %20 = arith.divf %19, %18 : vector<8x128xf32>
    %cst_11 = arith.constant dense<0.000000e+00> : vector<8xf32>
    %21 = vector.multi_reduction <add>, %20, %cst_11 [1] : vector<8x128xf32> to vector<8xf32>
    %22 = vector.shape_cast %21 : vector<8xf32> to vector<8x1xf32>
    %23 = vector.broadcast %22 : vector<8x1xf32> to vector<8x128xf32>
    %24 = arith.divf %20, %23 : vector<8x128xf32>
    %c0_12 = arith.constant 0 : index
    %c0_13 = arith.constant 0 : index
    %25 = vector.load %arg4[%c0_12, %c0_13] : memref<8x128xf32, #tpu.memory_space<vmem>>, vector<8x128xf32>
    tpu.vector_store %arg4[%c0_12, %c0_13], %24 {strides = array<i32>} : memref<8x128xf32, #tpu.memory_space<vmem>>, vector<8x128xf32>,
    return
  }
  func.func @transform_0(%arg0: i32) -> (i32, i32) {
    %c0_i32 = arith.constant 0 : i32
    %c0_i32_0 = arith.constant 0 : i32
    return %arg0, %c0_i32 : i32, i32
  }
  func.func @transform_1(%arg0: i32) -> (i32, i32) {
    %c0_i32 = arith.constant 0 : i32
    %c0_i32_0 = arith.constant 0 : i32
    %c0_i32_1 = arith.constant 0 : i32
    return %c0_i32, %c0_i32_0 : i32, i32
  }
  func.func @transform_2(%arg0: i32) -> (i32, i32) {
    %c0_i32 = arith.constant 0 : i32
    %c0_i32_0 = arith.constant 0 : i32
    %c0_i32_1 = arith.constant 0 : i32
    return %c0_i32, %c0_i32_0 : i32, i32
  }
  func.func @transform_3(%arg0: i32) -> (i32, i32) {
    %c0_i32 = arith.constant 0 : i32
    %c0_i32_0 = arith.constant 0 : i32
    return %arg0, %c0_i32 : i32, i32
  }
}

</mosaic_0001>

<llo_original>
// kernel: tpu_custom_call.1
$region0: #{tpu_custom_call.1}
  #allocation0 [shape = 'u32[]', space=smem, size = 0x4, offset = 0x4, fixed_abs, tag = 'smem constant byte address 0x4 - core index']
  #allocation1 [shape = 'u32[144,128]{1,0:T(1,128)}', space=vmem, size = 0x12000, scoped, tag = 'internal scratch']
  %s0 = inlined_call_operand.hbm [shape: f32[8,32], index: 0, kind: input, shape index: {}]
  %s1 = inlined_call_operand.hbm [shape: f32[32,128], index: 1, kind: input, shape index: {}]
  %s2 = inlined_call_operand.vmem [shape: f32[1,128], index: 2, kind: input, shape index: {}]
  %s3 = inlined_call_operand.hbm [shape: f32[8,128], index: 3, kind: output, shape index: {}]
  %s4 = sld [smem:[#allocation0]]
  $region30: #{tpu_custom_call.1} parent=0
    _
  %s6 = ssub.s32 1, %s4
  %s7 = scalar_select 0, %s6, %s4
  $region1: #{tpu_custom_call.1} parent=0
    #allocation2 [shape = 'u8[4096]{0}', space=vmem, size = 0x1000, scoped, tag = 'input window, operand 0, single buffered']
    #allocation3 [shape = 's32[1]{0}', space=sflag, size = 0x4, scoped, tag = 'scoped memory for tpu_custom_call.1']
    #allocation4 [shape = 's32[1]{0}', space=sflag, size = 0x4, scoped, tag = 'scoped memory for tpu_custom_call.1']
    #allocation5 [shape = 'u8[16384]{0}', space=vmem, size = 0x4000, scoped, tag = 'input window, operand 1, single buffered']
    #allocation6 [shape = 's32[1]{0}', space=sflag, size = 0x4, scoped, tag = 'scoped memory for tpu_custom_call.1']
    #allocation7 [shape = 'u8[4096]{0}', space=vmem, size = 0x1000, scoped, tag = 'output window, operand 0, single buffered']
    %8 = vsyncpa [#allocation3], 0
    %9 = vsyncpa [#allocation6], 0
    %10 = vsyncpa [#allocation4], 0
    // Predicated region
    $region2: #{tpu_custom_call.1} parent=1 // pred_check
      _
    $region3: #{tpu_custom_call.1} parent=1 // pred_check_branch
      %12 = sbr.rel (0) target = $region5
    $region4: #{tpu_custom_call.1} parent=1 // pred_region
      %s14 = ssub.s32 128, 128
      %15 = vsyncadd [#allocation3], %s14
      %s17 = sshll.u32 [#allocation2], 4
      %s18 = int_to_ptr.vmem [resolvable:$true] %s17
      %20 = dma.hbm_to_vmem [thread:$0]  %s0, 128, %s18, [#allocation3]
    $region5: #{tpu_custom_call.1} parent=1 // pred_fallthru
      _
    // Predicated region
    $region6: #{tpu_custom_call.1} parent=1 // pred_check
      _
    $region7: #{tpu_custom_call.1} parent=1 // pred_check_branch
      %22 = sbr.rel (0) target = $region9
    $region8: #{tpu_custom_call.1} parent=1 // pred_region
      %s24 = ssub.s32 512, 512
      %25 = vsyncadd [#allocation6], %s24
      %s26 = sshll.u32 [#allocation5], 4
      %s27 = int_to_ptr.vmem [resolvable:$true] %s26
      %32 = dma.hbm_to_vmem [thread:$0]  %s1, 512, %s27, [#allocation6], 128, 128, 8
    $region9: #{tpu_custom_call.1} parent=1 // pred_fallthru
      _
    // Predicated region
    $region10: #{tpu_custom_call.1} parent=1 // pred_check
      _
    $region11: #{tpu_custom_call.1} parent=1 // pred_check_branch
      %34 = sbr.rel (0) target = $region13
    $region12: #{tpu_custom_call.1} parent=1 // pred_region
      _
    $region13: #{tpu_custom_call.1} parent=1 // pred_fallthru
      _
    // Predicated region
    $region14: #{tpu_custom_call.1} parent=1 // pred_check
      _
    $region15: #{tpu_custom_call.1} parent=1 // pred_check_branch
      %36 = sbr.rel (0) target = $region17
    $region16: #{tpu_custom_call.1} parent=1 // pred_region
      %37 = dma.done [#allocation3], 128
    $region17: #{tpu_custom_call.1} parent=1 // pred_fallthru
      _
    // Predicated region
    $region18: #{tpu_custom_call.1} parent=1 // pred_check
      _
    $region19: #{tpu_custom_call.1} parent=1 // pred_check_branch
      %39 = sbr.rel (0) target = $region21
    $region20: #{tpu_custom_call.1} parent=1 // pred_region
      %40 = dma.done [#allocation6], 512
    $region21: #{tpu_custom_call.1} parent=1 // pred_fallthru
      _
    %v41 = vld [vmem:[#allocation2] sm:$0xff]
    %v42 = vld [vmem:[#allocation5] sm:$0xff]
    %v43 = vld [vmem:[#allocation5 + $0x8] sm:$0xff]
    %v44 = vld [vmem:[#allocation5 + $0x10] sm:$0xff]
    %v45 = vld [vmem:[#allocation5 + $0x18] sm:$0xff]
    %vm46 = vcmask 261120
    %v48 = vsel %vm46, %v41, 0
    %50 = vmatprep.subr.mxu0 0.0
    %51 = vmatpush1.msra.mxu0 0.0
    %52 = vmatprep.subr.mxu0 0.0
    %53 = vmatpush1.msra.mxu0 0.0
    %54 = vmatprep.subr.mxu0 0.0
    %55 = vmatpush1.msra.mxu0 0.0
    %56 = vmatprep.subr.mxu0 0.0
    %57 = vmatpush1.msra.mxu0 0.0
    %58 = vmatprep.subr.mxu0 0.0
    %59 = vmatpush1.msra.mxu0 0.0
    %60 = vmatprep.subr.mxu0 0.0
    %61 = vmatpush1.msra.mxu0 0.0
    %62 = vmatprep.subr.mxu0 0.0
    %63 = vmatpush1.msra.mxu0 0.0
    %64 = vmatprep.subr.mxu0 0.0
    %65 = vmatpush1.msra.mxu0 0.0
    %66 = vmatprep.subr.mxu0 0.0
    %67 = vmatpush1.msra.mxu0 0.0
    %68 = vmatprep.subr.mxu0 0.0
    %69 = vmatpush1.msra.mxu0 0.0
    %70 = vmatprep.subr.mxu0 0.0
    %71 = vmatpush1.msra.mxu0 0.0
    %72 = vmatprep.subr.mxu0 0.0
    %73 = vmatpush1.msra.mxu0 0.0
    %74 = vmatprep.subr.mxu0 0.0
    %75 = vmatpush1.msra.mxu0 %v45
    %76 = vmatprep.subr.mxu0 0.0
    %77 = vmatpush1.msra.mxu0 %v44
    %78 = vmatprep.subr.mxu0 0.0
    %79 = vmatpush1.msra.mxu0 %v43
    %80 = vmatprep.subr.mxu0 0.0
    %81 = vmatpush1.msra.mxu0 %v42
    %82 = vmatprep.subr.mxu0 0.0
    %83 = vmatpush2.msra.mxu0 0.0
    %84 = vmatprep.subr.mxu0 0.0
    %85 = vmatpush2.msra.mxu0 0.0
    %86 = vmatprep.subr.mxu0 0.0
    %87 = vmatpush2.msra.mxu0 0.0
    %88 = vmatprep.subr.mxu0 0.0
    %89 = vmatpush2.msra.mxu0 0.0
    %90 = vmatprep.subr.mxu0 0.0
    %91 = vmatpush2.msra.mxu0 0.0
    %92 = vmatprep.subr.mxu0 0.0
    %93 = vmatpush2.msra.mxu0 0.0
    %94 = vmatprep.subr.mxu0 0.0
    %95 = vmatpush2.msra.mxu0 0.0
    %96 = vmatprep.subr.mxu0 0.0
    %97 = vmatpush2.msra.mxu0 0.0
    %98 = vmatprep.subr.mxu0 0.0
    %99 = vmatpush2.msra.mxu0 0.0
    %100 = vmatprep.subr.mxu0 0.0
    %101 = vmatpush2.msra.mxu0 0.0
    %102 = vmatprep.subr.mxu0 0.0
    %103 = vmatpush2.msra.mxu0 0.0
    %104 = vmatprep.subr.mxu0 0.0
    %105 = vmatpush2.msra.mxu0 0.0
    %106 = vmatprep.subr.mxu0 0.0
    %107 = vmatpush2.msra.mxu0 0.0
    %108 = vmatprep.subr.mxu0 0.0
    %109 = vmatpush2.msra.mxu0 0.0
    %110 = vmatprep.subr.mxu0 0.0
    %111 = vmatpush2.msra.mxu0 0.0
    %112 = vmatprep.subr.mxu0 0.0
    %113 = vmatpush2.msra.mxu0 0.0
    %114 = vmatprep.mubr.f32.mxu0 0.0
    %115 = vmatmul.mubr.f32.gmra.mxu0 %v48
    %v116 = vpop.f32.mrf.mxu0
    %v117 = vadd.f32 0.0, %v116
    %v118 = vpop.f32.mrf.mxu0
    %119 = vdwg.mxu0
    %v120 = vmul.f32 %v41, %v41
    %v121 = vsel %vm46, %v120, 0.0
    %122 = vadd.xlane.f32.xlu0 %v121
    %v123 = vpop.xlane.xlu0 %122
    %v124 = vld [vmem:[%s2] sm:$0x1]
    %v126 = vlaneseq
    %v127 = vshrl.u32 %v126, 7
    %v128 = vsub.s32 0, %v127
    %v129 = vrot.slane %v124, %v128
    %v131 = vadd.f32 %v123, %v129
    %v132 = vmul.f32 %v117, 2.0
    %v133 = vsub.f32 %v131, %v132
    %v134 = vmax.f32 %v133, 0.0
    %v135 = vadd.f32 %v134, 1.0
    %v136 = vrcp.pop %v135
    %v137 = vmul.f32 1.0, %v136
    %138 = vadd.xlane.f32.xlu0 %v137
    %v139 = vpop.xlane.xlu0 %138
    %v140 = vrcp.pop %v139
    %v141 = vmul.f32 %v137, %v140
    %142 = vst [vmem:[#allocation7] sm:$0xff] %v141
    // Predicated region
    $region22: #{tpu_custom_call.1} parent=1 // pred_check
      _
    $region23: #{tpu_custom_call.1} parent=1 // pred_check_branch
      %144 = sbr.rel (0) target = $region25
    $region24: #{tpu_custom_call.1} parent=1 // pred_region
      %s146 = ssub.s32 128, 128
      %147 = vsyncadd [#allocation4], %s146
      %s149 = sshll.u32 [#allocation7], 4
      %s150 = int_to_ptr.vmem [resolvable:$true] %s149
      %152 = dma.vmem_to_hbm [thread:$0]  %s150, 128, %s3, [#allocation4]
    $region25: #{tpu_custom_call.1} parent=1 // pred_fallthru
      _
    // Predicated region
    $region26: #{tpu_custom_call.1} parent=1 // pred_check
      _
    $region27: #{tpu_custom_call.1} parent=1 // pred_check_branch
      %154 = sbr.rel (0) target = $region29
    $region28: #{tpu_custom_call.1} parent=1 // pred_region
      %155 = dma.done [#allocation4], 128
    $region29: #{tpu_custom_call.1} parent=1 // pred_fallthru
      _
    %156 = vsyncpa [#allocation3], 1
    %157 = vsyncpa [#allocation6], 1
    %158 = vsyncpa [#allocation4], 1

</llo_original>
